<compile_context>
chip_gen: v5e
topology: v5e:2x2
jax: 0.10.0
libtpu: 0.0.40
codegen_flags: <defaults>
</compile_context>

<pallas_src>
import functools

import jax
import jax.numpy as jnp
from jax.experimental import pallas as pl
from jax.experimental.pallas import tpu as pltpu


def _round_up(n, m):
    return ((n + m - 1) // m) * m


def _self_attention_kernel(x_ref, w_ref, b_ref, o_ref, *, batch, seq, d_pad):
    # ---- Fused QKV projection over all B*S rows at once (single MXU matmul).
    # x_ref: (B*S, D), w_ref: (D, 3*Dp) pre-transposed, b_ref: (1, 3*Dp).
    qkv = jnp.dot(x_ref[...], w_ref[...],
                  preferred_element_type=jnp.float32) + b_ref[...]
    # Split the leading (B*S) rows back into (B, S): layout no-op (16 -> 2x8,
    # minor dims untouched, stays on (8,128) tile boundaries).
    qkv = qkv.reshape(batch, seq, 3 * d_pad)

    # ---- Lane-aligned static slices (each slab is Dp = multiple of 128 wide).
    q = qkv[:, :, 0:d_pad]
    k = qkv[:, :, d_pad:2 * d_pad]
    v = qkv[:, :, 2 * d_pad:3 * d_pad]

    # ---- scores = q @ k^T, contracting the feature axis directly.
    # NOTE: no 1/sqrt(D) scaling -- the reference module has none.
    s = jnp.einsum('bqd,bkd->bqk', q, k, preferred_element_type=jnp.float32)

    # ---- Numerically stable softmax over the key axis (XLU reductions).
    s = s - jnp.max(s, axis=-1, keepdims=True)
    p = jnp.exp(s)                                             # EUP
    p = p * pl.reciprocal(jnp.sum(p, axis=-1, keepdims=True),  # EUP recip
                          approx=True)

    # ---- attended = softmax(scores) @ v  -> (B, S, Dp); lane-dense store.
    o = jnp.einsum('bqk,bkd->bqd', p, v, preferred_element_type=jnp.float32)
    o_ref[...] = o.astype(o_ref.dtype)


def pack_qkv_params(wq, wk, wv, bq, bk, bv):
    """One-time packing: transpose torch (out, in) weights to (in, out),
    zero-pad the out dim to a multiple of 128 lanes, and fuse Q/K/V."""
    d = wq.shape[1]
    d_pad = _round_up(d, 128)

    def pad_w(w):                      # (out, in) -> (in, out_pad)
        return jnp.pad(w.T, ((0, 0), (0, d_pad - d)))

    def pad_b(b):
        return jnp.pad(b.reshape(1, d), ((0, 0), (0, d_pad - d)))

    w_qkv = jnp.concatenate([pad_w(wq), pad_w(wk), pad_w(wv)], axis=1)
    b_qkv = jnp.concatenate([pad_b(bq), pad_b(bk), pad_b(bv)], axis=1)
    return w_qkv, b_qkv


@jax.jit
def self_attention(x, w_qkv, b_qkv):
    """x: (B, S, D) float32.  w_qkv: (D, 3*Dp), b_qkv: (1, 3*Dp) (pre-packed)."""
    B, S, D = x.shape
    Dp = w_qkv.shape[1] // 3

    kernel = functools.partial(_self_attention_kernel,
                               batch=B, seq=S, d_pad=Dp)

    out_padded = pl.pallas_call(
        kernel,
        out_shape=jax.ShapeDtypeStruct((B, S, Dp), jnp.float32),
        grid_spec=pltpu.PrefetchScalarGridSpec(
            num_scalar_prefetch=0,
            grid=(1,),                                  # whole problem VMEM-resident
            in_specs=[
                pl.BlockSpec((B * S, D), lambda i: (0, 0)),    # x, flattened rows
                pl.BlockSpec((D, 3 * Dp), lambda i: (0, 0)),   # fused Wqkv (pre-T)
                pl.BlockSpec((1, 3 * Dp), lambda i: (0, 0)),   # fused bias
            ],
            out_specs=pl.BlockSpec((B, S, Dp), lambda i: (0, 0, 0)),
        ),
        compiler_params=pltpu.CompilerParams(
            dimension_semantics=("arbitrary",)),
    )(x.reshape(B * S, D), w_qkv, b_qkv)

    # Drop the zero padding lanes (wrapper-side layout plumbing, one-time slice).
    return out_padded[:, :, :D]


def _reference(x, wq, wk, wv, bq, bk, bv):
    q = x @ wq.T + bq
    k = x @ wk.T + bk
    v = x @ wv.T + bv
    s = q @ jnp.swapaxes(k, -2, -1)
    p = jax.nn.softmax(s, axis=-1)
    return p @ v


if __name__ == "__main__":
    B, S, D = 2, 8, 32   # batch, seq, input_size (feature dim of Fusion.npy)
    key = jax.random.PRNGKey(0)
    kx, kq, kk, kv, kbq, kbk, kbv = jax.random.split(key, 7)

    x = jax.random.normal(kx, (B, S, D), dtype=jnp.float32)

    # Deterministic parameter init (mimics nn.Linear uniform(-1/sqrt(D), 1/sqrt(D)))
    bound = 1.0 / (D ** 0.5)
    wq = jax.random.uniform(kq, (D, D), jnp.float32, -bound, bound)
    wk = jax.random.uniform(kk, (D, D), jnp.float32, -bound, bound)
    wv = jax.random.uniform(kv, (D, D), jnp.float32, -bound, bound)
    bq = jax.random.uniform(kbq, (D,), jnp.float32, -bound, bound)
    bk = jax.random.uniform(kbk, (D,), jnp.float32, -bound, bound)
    bv = jax.random.uniform(kbv, (D,), jnp.float32, -bound, bound)

    # One-time weight packing (outside the kernel / jit boundary).
    w_qkv, b_qkv = pack_qkv_params(wq, wk, wv, bq, bk, bv)

    out = self_attention(x, w_qkv, b_qkv)
    out = jax.block_until_ready(out)

    ref = _reference(x, wq, wk, wv, bq, bk, bv)
    assert out.shape == (B, S, D)
    # approx reciprocal in the softmax denominator -> slightly relaxed tolerance.
    assert jnp.allclose(out, ref, atol=5e-3, rtol=5e-3), "mismatch vs reference"
    print("KERNEL_OK")
</pallas_src>

<mosaic_0001>
module attributes {stable_mosaic.version = 11 : i64} {
  func.func @_self_attention_kernel(%arg0: i32, %arg1: memref<16x32xf32, #tpu.memory_space<vmem>>, %arg2: memref<32x384xf32, #tpu.memory_space<vmem>>, %arg3: memref<1x384xf32, #tpu.memory_space<vmem>>, %arg4: memref<2x8x128xf32, #tpu.memory_space<vmem>>) attributes {dimension_semantics = [#tpu.dimension_semantics<arbitrary>], iteration_bounds = array<i64: 1>, scalar_prefetch = 0 : i64, scratch_operands = 0 : i64, tpu.core_type = #tpu.core_type<tc>, window_params = [{pipeline_mode = #tpu.pipeline_mode<synchronous>, transform_indices = @transform_0, window_bounds = array<i64: 16, 32>}, {pipeline_mode = #tpu.pipeline_mode<synchronous>, transform_indices = @transform_1, window_bounds = array<i64: 32, 384>}, {pipeline_mode = #tpu.pipeline_mode<synchronous>, transform_indices = @transform_2, window_bounds = array<i64: 1, 384>}, {pipeline_mode = #tpu.pipeline_mode<synchronous>, transform_indices = @transform_3, window_bounds = array<i64: 2, 8, 128>}]} {
    %c0 = arith.constant 0 : index
    %c0_0 = arith.constant 0 : index
    %0 = vector.load %arg1[%c0, %c0_0] : memref<16x32xf32, #tpu.memory_space<vmem>>, vector<16x32xf32>
    %c0_1 = arith.constant 0 : index
    %c0_2 = arith.constant 0 : index
    %1 = vector.load %arg2[%c0_1, %c0_2] : memref<32x384xf32, #tpu.memory_space<vmem>>, vector<32x384xf32>
    %cst = arith.constant dense<0.000000e+00> : vector<16x384xf32>
    %2 = tpu.matmul %0, %1, %cst {dimension_numbers = #tpu.dot_dimension_numbers<[1], [0], [0], [1], [0, 0, 1, 1], [], []>} : vector<16x32xf32>, vector<32x384xf32>, vector<16x384xf32> -> vector<16x384xf32>
    %c0_3 = arith.constant 0 : index
    %c0_4 = arith.constant 0 : index
    %3 = vector.load %arg3[%c0_3, %c0_4] : memref<1x384xf32, #tpu.memory_space<vmem>>, vector<1x384xf32>
    %4 = vector.broadcast %3 : vector<1x384xf32> to vector<16x384xf32>
    %5 = arith.addf %2, %4 : vector<16x384xf32>
    %6 = vector.shape_cast %5 : vector<16x384xf32> to vector<2x8x384xf32>
    %7 = vector.extract_strided_slice %6 {offsets = [0, 0, 0], sizes = [2, 8, 128], strides = [1, 1, 1]} : vector<2x8x384xf32> to vector<2x8x128xf32>
    %8 = vector.extract_strided_slice %6 {offsets = [0, 0, 128], sizes = [2, 8, 128], strides = [1, 1, 1]} : vector<2x8x384xf32> to vector<2x8x128xf32>
    %9 = vector.extract_strided_slice %6 {offsets = [0, 0, 256], sizes = [2, 8, 128], strides = [1, 1, 1]} : vector<2x8x384xf32> to vector<2x8x128xf32>
    "tpu.trace_start"() <{level = 10 : i32, message = "bqd,bkd->bqk"}> : () -> ()
    %cst_5 = arith.constant dense<0.000000e+00> : vector<2x8x8xf32>
    %10 = tpu.matmul %7, %8, %cst_5 {dimension_numbers = #tpu.dot_dimension_numbers<[2], [2], [1], [1], [0, 0, 0, 1, 1, 1], [0], [0]>} : vector<2x8x128xf32>, vector<2x8x128xf32>, vector<2x8x8xf32> -> vector<2x8x8xf32>
    "tpu.trace_stop"() : () -> ()
    %cst_6 = arith.constant dense<0xFF800000> : vector<2x8xf32>
    %11 = vector.multi_reduction <maximumf>, %10, %cst_6 [2] : vector<2x8x8xf32> to vector<2x8xf32>
    %12 = vector.shape_cast %11 : vector<2x8xf32> to vector<2x8x1xf32>
    %13 = vector.broadcast %12 : vector<2x8x1xf32> to vector<2x8x8xf32>
    %14 = arith.subf %10, %13 : vector<2x8x8xf32>
    %15 = math.exp %14 : vector<2x8x8xf32>
    %cst_7 = arith.constant dense<0.000000e+00> : vector<2x8xf32>
    %16 = vector.multi_reduction <add>, %15, %cst_7 [2] : vector<2x8x8xf32> to vector<2x8xf32>
    %17 = vector.shape_cast %16 : vector<2x8xf32> to vector<2x8x1xf32>
    %18 = tpu.reciprocal %17 {approx = true} : vector<2x8x1xf32> -> vector<2x8x1xf32>
    %19 = vector.broadcast %18 : vector<2x8x1xf32> to vector<2x8x8xf32>
    %20 = arith.mulf %15, %19 : vector<2x8x8xf32>
    "tpu.trace_start"() <{level = 10 : i32, message = "bqk,bkd->bqd"}> : () -> ()
    %cst_8 = arith.constant dense<0.000000e+00> : vector<2x8x128xf32>
    %21 = tpu.matmul %20, %9, %cst_8 {dimension_numbers = #tpu.dot_dimension_numbers<[2], [1], [1], [2], [0, 0, 0, 1, 1, 2], [0], [0]>} : vector<2x8x8xf32>, vector<2x8x128xf32>, vector<2x8x128xf32> -> vector<2x8x128xf32>
    "tpu.trace_stop"() : () -> ()
    %c0_9 = arith.constant 0 : index
    %c0_10 = arith.constant 0 : index
    %c0_11 = arith.constant 0 : index
    %22 = vector.load %arg4[%c0_9, %c0_10, %c0_11] : memref<2x8x128xf32, #tpu.memory_space<vmem>>, vector<2x8x128xf32>
    tpu.vector_store %arg4[%c0_9, %c0_10, %c0_11], %21 {strides = array<i32>} : memref<2x8x128xf32, #tpu.memory_space<vmem>>, vector<2x8x128xf32>,
    return
  }
  func.func @transform_0(%arg0: i32) -> (i32, i32) {
    %c0_i32 = arith.constant 0 : i32
    %c0_i32_0 = arith.constant 0 : i32
    %c0_i32_1 = arith.constant 0 : i32
    return %c0_i32, %c0_i32_0 : i32, i32
  }
  func.func @transform_1(%arg0: i32) -> (i32, i32) {
    %c0_i32 = arith.constant 0 : i32
    %c0_i32_0 = arith.constant 0 : i32
    %c0_i32_1 = arith.constant 0 : i32
    return %c0_i32, %c0_i32_0 : i32, i32
  }
  func.func @transform_2(%arg0: i32) -> (i32, i32) {
    %c0_i32 = arith.constant 0 : i32
    %c0_i32_0 = arith.constant 0 : i32
    %c0_i32_1 = arith.constant 0 : i32
    return %c0_i32, %c0_i32_0 : i32, i32
  }
  func.func @transform_3(%arg0: i32) -> (i32, i32, i32) {
    %c0_i32 = arith.constant 0 : i32
    %c0_i32_0 = arith.constant 0 : i32
    %c0_i32_1 = arith.constant 0 : i32
    %c0_i32_2 = arith.constant 0 : i32
    return %c0_i32, %c0_i32_0, %c0_i32_1 : i32, i32, i32
  }
}

</mosaic_0001>

<llo_original>
// kernel: self_attention.1
$region0: #{self_attention.1}
  #allocation0 [shape = 'u32[]', space=smem, size = 0x4, offset = 0x4, fixed_abs, tag = 'smem constant byte address 0x4 - core index']
  #allocation1 [shape = 'u32[72,128]{1,0:T(1,128)}', space=vmem, size = 0x9000, scoped, tag = 'internal scratch']
  %s0 = inlined_call_operand.hbm [shape: f32[16,32], index: 0, kind: input, shape index: {}]
  %s1 = inlined_call_operand.hbm [shape: f32[32,384], index: 1, kind: input, shape index: {}]
  %s2 = inlined_call_operand.hbm [shape: f32[1,384], index: 2, kind: input, shape index: {}]
  %s3 = inlined_call_operand.hbm [shape: f32[2,8,128], index: 3, kind: output, shape index: {}]
  %s4 = sld [smem:[#allocation0]]
  $region34: #{self_attention.1} parent=0
    _
  %s6 = ssub.s32 1, %s4
  %s7 = scalar_select 0, %s6, %s4
  $region1: #{self_attention.1} parent=0
    #allocation2 [shape = 'u8[8192]{0}', space=vmem, size = 0x2000, scoped, tag = 'input window, operand 0, single buffered']
    #allocation3 [shape = 's32[1]{0}', space=sflag, size = 0x4, scoped, tag = 'scoped memory for self_attention.1']
    #allocation4 [shape = 's32[1]{0}', space=sflag, size = 0x4, scoped, tag = 'scoped memory for self_attention.1']
    #allocation5 [shape = 'u8[49152]{0}', space=vmem, size = 0xc000, scoped, tag = 'input window, operand 1, single buffered']
    #allocation6 [shape = 's32[1]{0}', space=sflag, size = 0x4, scoped, tag = 'scoped memory for self_attention.1']
    #allocation7 [shape = 'u8[1536]{0}', space=vmem, size = 0x800, scoped, tag = 'input window, operand 2, single buffered']
    #allocation8 [shape = 'u8[8192]{0}', space=vmem, size = 0x2000, scoped, tag = 'output window, operand 0, single buffered']
    %8 = vsyncpa [#allocation3], 0
    %9 = vsyncpa [#allocation6], 0
    %10 = vsyncpa [#allocation4], 0
    // Predicated region
    $region2: #{self_attention.1} parent=1 // pred_check
      _
    $region3: #{self_attention.1} parent=1 // pred_check_branch
      %12 = sbr.rel (0) target = $region5
    $region4: #{self_attention.1} parent=1 // pred_region
      %14 = vsyncadd [#allocation3], 0
      %s15 = sshll.u32 %s0, 4
      %s16 = int_to_ptr.hbm [resolvable:$true] %s15
      %s17 = sshll.u32 [#allocation2], 4
      %s18 = int_to_ptr.vmem [resolvable:$true] %s17
      %23 = dma.hbm_to_vmem [thread:$0]  %s16, 256, %s18, [#allocation3], 128, 128, 8
    $region5: #{self_attention.1} parent=1 // pred_fallthru
      _
    // Predicated region
    $region6: #{self_attention.1} parent=1 // pred_check
      _
    $region7: #{self_attention.1} parent=1 // pred_check_branch
      %25 = sbr.rel (0) target = $region9
    $region8: #{self_attention.1} parent=1 // pred_region
      %27 = vsyncadd [#allocation6], 0
      %s28 = sshll.u32 %s1, 4
      %s29 = int_to_ptr.hbm [resolvable:$true] %s28
      %s30 = sshll.u32 [#allocation5], 4
      %s31 = int_to_ptr.vmem [resolvable:$true] %s30
      %36 = dma.hbm_to_vmem [thread:$0]  %s29, 1536, %s31, [#allocation6], 384, 384, 24
    $region9: #{self_attention.1} parent=1 // pred_fallthru
      _
    // Predicated region
    $region10: #{self_attention.1} parent=1 // pred_check
      _
    $region11: #{self_attention.1} parent=1 // pred_check_branch
      %38 = sbr.rel (0) target = $region13
    $region12: #{self_attention.1} parent=1 // pred_region
      %40 = vsyncadd [#allocation6], 0
      %s42 = sshll.u32 %s2, 4
      %s43 = int_to_ptr.hbm [resolvable:$true] %s42
      %s44 = sshll.u32 [#allocation7], 4
      %s45 = int_to_ptr.vmem [resolvable:$true] %s44
      %47 = dma.hbm_to_vmem [thread:$0]  %s43, 48, %s45, [#allocation6]
    $region13: #{self_attention.1} parent=1 // pred_fallthru
      _
    // Predicated region
    $region14: #{self_attention.1} parent=1 // pred_check
      _
    $region15: #{self_attention.1} parent=1 // pred_check_branch
      %49 = sbr.rel (0) target = $region17
    $region16: #{self_attention.1} parent=1 // pred_region
      %51 = dma.done [#allocation3], 256
    $region17: #{self_attention.1} parent=1 // pred_fallthru
      _
    // Predicated region
    $region18: #{self_attention.1} parent=1 // pred_check
      _
    $region19: #{self_attention.1} parent=1 // pred_check_branch
      %53 = sbr.rel (0) target = $region21
    $region20: #{self_attention.1} parent=1 // pred_region
      %55 = dma.done [#allocation6], 1536
    $region21: #{self_attention.1} parent=1 // pred_fallthru
      _
    // Predicated region
    $region22: #{self_attention.1} parent=1 // pred_check
      _
    $region23: #{self_attention.1} parent=1 // pred_check_branch
      %57 = sbr.rel (0) target = $region25
    $region24: #{self_attention.1} parent=1 // pred_region
      %59 = dma.done [#allocation6], 48
    $region25: #{self_attention.1} parent=1 // pred_fallthru
      _
    %v60 = vld [vmem:[#allocation2] sm:$0xff]
    %v61 = vld [vmem:[#allocation2 + $0x8] sm:$0xff]
    %v62 = vld [vmem:[#allocation5] sm:$0xff]
    %v63 = vld [vmem:[#allocation5 + $0x8] sm:$0xff]
    %v64 = vld [vmem:[#allocation5 + $0x10] sm:$0xff]
    %v65 = vld [vmem:[#allocation5 + $0x18] sm:$0xff]
    %v66 = vld [vmem:[#allocation5 + $0x20] sm:$0xff]
    %v67 = vld [vmem:[#allocation5 + $0x28] sm:$0xff]
    %v68 = vld [vmem:[#allocation5 + $0x30] sm:$0xff]
    %v69 = vld [vmem:[#allocation5 + $0x38] sm:$0xff]
    %v70 = vld [vmem:[#allocation5 + $0x40] sm:$0xff]
    %v71 = vld [vmem:[#allocation5 + $0x48] sm:$0xff]
    %v72 = vld [vmem:[#allocation5 + $0x50] sm:$0xff]
    %v73 = vld [vmem:[#allocation5 + $0x58] sm:$0xff]
    %v74 = vld [vmem:[#allocation7] sm:$0x7]
    %v76 = vperm.slane %v74, 0
    %v77 = vperm.slane %v74, 1
    %v78 = vperm.slane %v74, 2
    %vm82 = vcmask 261120
    %v84 = vsel %vm82, %v60, 0
    %v87 = vsel %vm82, %v61, 0
    %89 = vmatpush.msra.mxu0 0.0
    %90 = vmatpush.msra.mxu0 0.0
    %91 = vmatpush.msra.mxu0 0.0
    %92 = vmatpush.msra.mxu0 0.0
    %93 = vmatpush.msra.mxu0 0.0
    %94 = vmatpush.msra.mxu0 0.0
    %95 = vmatpush.msra.mxu0 0.0
    %96 = vmatpush.msra.mxu0 0.0
    %97 = vmatpush.msra.mxu0 0.0
    %98 = vmatpush.msra.mxu0 0.0
    %99 = vmatpush.msra.mxu0 0.0
    %100 = vmatpush.msra.mxu0 0.0
    %101 = vmatpush.msra.mxu0 %v71
    %102 = vmatpush.msra.mxu0 %v68
    %103 = vmatpush.msra.mxu0 %v65
    %104 = vmatpush.msra.mxu0 %v62
    %105 = vmatmul.f32.gmra.mxu0 %v84
    %v106 = vpop.f32.mrf.mxu0
    %v107 = vadd.f32 %v76, %v106
    %108 = vmatmul.f32.gmra.mxu0 %v87
    %v109 = vpop.f32.mrf.mxu0
    %v110 = vadd.f32 %v76, %v109
    %111 = vdwg.mxu0
    %112 = vmatpush.msra.mxu0 0.0
    %113 = vmatpush.msra.mxu0 0.0
    %114 = vmatpush.msra.mxu0 0.0
    %115 = vmatpush.msra.mxu0 0.0
    %116 = vmatpush.msra.mxu0 0.0
    %117 = vmatpush.msra.mxu0 0.0
    %118 = vmatpush.msra.mxu0 0.0
    %119 = vmatpush.msra.mxu0 0.0
    %120 = vmatpush.msra.mxu0 0.0
    %121 = vmatpush.msra.mxu0 0.0
    %122 = vmatpush.msra.mxu0 0.0
    %123 = vmatpush.msra.mxu0 0.0
    %124 = vmatpush.msra.mxu0 %v72
    %125 = vmatpush.msra.mxu0 %v69
    %126 = vmatpush.msra.mxu0 %v66
    %127 = vmatpush.msra.mxu0 %v63
    %128 = vmatmul.f32.gmra.mxu0 %v84
    %v129 = vpop.f32.mrf.mxu0
    %v130 = vadd.f32 %v77, %v129
    %131 = vmatmul.f32.gmra.mxu0 %v87
    %v132 = vpop.f32.mrf.mxu0
    %v133 = vadd.f32 %v77, %v132
    %134 = vdwg.mxu0
    %135 = vmatpush.msra.mxu0 0.0
    %136 = vmatpush.msra.mxu0 0.0
    %137 = vmatpush.msra.mxu0 0.0
    %138 = vmatpush.msra.mxu0 0.0
    %139 = vmatpush.msra.mxu0 0.0
    %140 = vmatpush.msra.mxu0 0.0
    %141 = vmatpush.msra.mxu0 0.0
    %142 = vmatpush.msra.mxu0 0.0
    %143 = vmatpush.msra.mxu0 0.0
    %144 = vmatpush.msra.mxu0 0.0
    %145 = vmatpush.msra.mxu0 0.0
    %146 = vmatpush.msra.mxu0 0.0
    %147 = vmatpush.msra.mxu0 %v73
    %148 = vmatpush.msra.mxu0 %v70
    %149 = vmatpush.msra.mxu0 %v67
    %150 = vmatpush.msra.mxu0 %v64
    %151 = vmatmul.f32.gmra.mxu0 %v84
    %v152 = vpop.f32.mrf.mxu0
    %v153 = vadd.f32 %v78, %v152
    %154 = vmatmul.f32.gmra.mxu0 %v87
    %v155 = vpop.f32.mrf.mxu0
    %v156 = vadd.f32 %v78, %v155
    %157 = vdwg.mxu0
    %158 = vmatpush.xpose.msra.mxu0 0.0
    %159 = vmatpush.xpose.msra.mxu0 0.0
    %160 = vmatpush.xpose.msra.mxu0 0.0
    %161 = vmatpush.xpose.msra.mxu0 0.0
    %162 = vmatpush.xpose.msra.mxu0 0.0
    %163 = vmatpush.xpose.msra.mxu0 0.0
    %164 = vmatpush.xpose.msra.mxu0 0.0
    %165 = vmatpush.xpose.msra.mxu0 0.0
    %166 = vmatpush.xpose.msra.mxu0 0.0
    %167 = vmatpush.xpose.msra.mxu0 0.0
    %168 = vmatpush.xpose.msra.mxu0 0.0
    %169 = vmatpush.xpose.msra.mxu0 0.0
    %170 = vmatpush.xpose.msra.mxu0 0.0
    %171 = vmatpush.xpose.msra.mxu0 0.0
    %172 = vmatpush.xpose.msra.mxu0 0.0
    %173 = vmatpush.xpose.msra.mxu0 %v130
    %174 = vmatmul.f32.gmra.mxu0 %v107
    %v175 = vpop.f32.mrf.mxu0
    %v176 = vadd.f32 0.0, %v175
    %177 = vdwg.mxu0
    %178 = vmatpush.xpose.msra.mxu0 0.0
    %179 = vmatpush.xpose.msra.mxu0 0.0
    %180 = vmatpush.xpose.msra.mxu0 0.0
    %181 = vmatpush.xpose.msra.mxu0 0.0
    %182 = vmatpush.xpose.msra.mxu0 0.0
    %183 = vmatpush.xpose.msra.mxu0 0.0
    %184 = vmatpush.xpose.msra.mxu0 0.0
    %185 = vmatpush.xpose.msra.mxu0 0.0
    %186 = vmatpush.xpose.msra.mxu0 0.0
    %187 = vmatpush.xpose.msra.mxu0 0.0
    %188 = vmatpush.xpose.msra.mxu0 0.0
    %189 = vmatpush.xpose.msra.mxu0 0.0
    %190 = vmatpush.xpose.msra.mxu0 0.0
    %191 = vmatpush.xpose.msra.mxu0 0.0
    %192 = vmatpush.xpose.msra.mxu0 0.0
    %193 = vmatpush.xpose.msra.mxu0 %v133
    %194 = vmatmul.f32.gmra.mxu0 %v110
    %v195 = vpop.f32.mrf.mxu0
    %v196 = vadd.f32 0.0, %v195
    %197 = vdwg.mxu0
    %vm198 = vcmask 64512
    %v199 = vsel %vm198, %v176, -inf
    %200 = vmax.xlane.f32.xlu0 %v199
    %v201 = vpop.xlane.xlu0 %200
    %v202 = vsel %vm198, %v196, -inf
    %203 = vmax.xlane.f32.xlu0 %v202
    %v204 = vpop.xlane.xlu0 %203
    %v205 = vsub.f32 %v176, %v201
    %v206 = vsub.f32 %v196, %v204
    %v207 = vmul.f32 %v205, 1.442695
    %v208 = vpow.pop %v207
    %v209 = vmul.f32 %v206, 1.442695
    %v210 = vpow.pop %v209
    %v211 = vsel %vm198, %v208, 0.0
    %212 = vadd.xlane.f32.xlu0 %v211
    %v213 = vpop.xlane.xlu0 %212
    %v214 = vsel %vm198, %v210, 0.0
    %215 = vadd.xlane.f32.xlu0 %v214
    %v216 = vpop.xlane.xlu0 %215
    %v217 = vrcp.pop %v213
    %v218 = vrcp.pop %v216
    %v219 = vmul.f32 %v208, %v217
    %v220 = vmul.f32 %v210, %v218
    %v222 = vsel %vm198, %v219, 0
    %224 = vmatpush.msra.mxu0 0.0
    %225 = vmatpush.msra.mxu0 0.0
    %226 = vmatpush.msra.mxu0 0.0
    %227 = vmatpush.msra.mxu0 0.0
    %228 = vmatpush.msra.mxu0 0.0
    %229 = vmatpush.msra.mxu0 0.0
    %230 = vmatpush.msra.mxu0 0.0
    %231 = vmatpush.msra.mxu0 0.0
    %232 = vmatpush.msra.mxu0 0.0
    %233 = vmatpush.msra.mxu0 0.0
    %234 = vmatpush.msra.mxu0 0.0
    %235 = vmatpush.msra.mxu0 0.0
    %236 = vmatpush.msra.mxu0 0.0
    %237 = vmatpush.msra.mxu0 0.0
    %238 = vmatpush.msra.mxu0 0.0
    %239 = vmatpush.msra.mxu0 %v153
    %240 = vmatmul.f32.gmra.mxu0 %v222
    %v241 = vpop.f32.mrf.mxu0
    %v242 = vadd.f32 0.0, %v241
    %243 = vdwg.mxu0
    %v245 = vsel %vm198, %v220, 0
    %247 = vmatpush.msra.mxu0 0.0
    %248 = vmatpush.msra.mxu0 0.0
    %249 = vmatpush.msra.mxu0 0.0
    %250 = vmatpush.msra.mxu0 0.0
    %251 = vmatpush.msra.mxu0 0.0
    %252 = vmatpush.msra.mxu0 0.0
    %253 = vmatpush.msra.mxu0 0.0
    %254 = vmatpush.msra.mxu0 0.0
    %255 = vmatpush.msra.mxu0 0.0
    %256 = vmatpush.msra.mxu0 0.0
    %257 = vmatpush.msra.mxu0 0.0
    %258 = vmatpush.msra.mxu0 0.0
    %259 = vmatpush.msra.mxu0 0.0
    %260 = vmatpush.msra.mxu0 0.0
    %261 = vmatpush.msra.mxu0 0.0
    %262 = vmatpush.msra.mxu0 %v156
    %263 = vmatmul.f32.gmra.mxu0 %v245
    %v264 = vpop.f32.mrf.mxu0
    %v265 = vadd.f32 0.0, %v264
    %266 = vdwg.mxu0
    %267 = vst [vmem:[#allocation8] sm:$0xff] %v242
    %268 = vst [vmem:[#allocation8 + $0x8] sm:$0xff] %v265
    // Predicated region
    $region26: #{self_attention.1} parent=1 // pred_check
      _
    $region27: #{self_attention.1} parent=1 // pred_check_branch
      %270 = sbr.rel (0) target = $region29
    $region28: #{self_attention.1} parent=1 // pred_region
      %272 = vsyncadd [#allocation4], 0
      %s273 = sshll.u32 [#allocation8], 4
      %s274 = int_to_ptr.vmem [resolvable:$true] %s273
      %s275 = sshll.u32 %s3, 4
      %s276 = int_to_ptr.hbm [resolvable:$true] %s275
      %281 = dma.vmem_to_hbm [thread:$0]  %s274, 256, %s276, [#allocation4], 128, 128, 8
    $region29: #{self_attention.1} parent=1 // pred_fallthru
      _
    // Predicated region
    $region30: #{self_attention.1} parent=1 // pred_check
      _
    $region31: #{self_attention.1} parent=1 // pred_check_branch
      %283 = sbr.rel (0) target = $region33
    $region32: #{self_attention.1} parent=1 // pred_region
      %285 = dma.done [#allocation4], 256
    $region33: #{self_attention.1} parent=1 // pred_fallthru
      _
    %286 = vsyncpa [#allocation3], 1
    %287 = vsyncpa [#allocation6], 1
    %288 = vsyncpa [#allocation4], 1

</llo_original>
